<compile_context>
chip_gen: v6e
topology: v6e:2x2x1
jax: 0.10.0
libtpu: 0.0.40
codegen_flags: <defaults>
</compile_context>

<pallas_src>
import functools

import jax
import jax.numpy as jnp
from jax.experimental import pallas as pl
from jax.experimental.pallas import tpu as pltpu

ALPHA = 0.2        # LeakyReLU negative slope
NEG_INF = -9e15    # mask value used by dense GAT


def _pick_tile(n, max_tile=256):
    """Largest clean row-tile (multiple of 32) dividing n, capped at max_tile."""
    if n <= max_tile:
        return n
    for t in (max_tile, 128, 64, 32):
        if n % t == 0:
            return t
    return n  # fallback: no tiling


# ----------------------------------------------------------------------------
# Kernel 1: node-level attention, ALL heads of one type fused in one call.
# ----------------------------------------------------------------------------
def _node_attention_kernel(x_ref, y_ref, adj_ref, w2_ref, s1c_ref, s2c_ref,
                           o_ref, *, nhid, nheads, alpha):
    x = x_ref[...]                                                   # [TN, tfeat] bf16
    y = y_ref[...]                                                   # [M,  nf]    bf16
    # All heads' projected neighbor features in one wide MXU matmul (f32 acc).
    h2_all = jnp.dot(y, w2_ref[...],
                     preferred_element_type=jnp.float32)             # [M, H*nhid]
    # Folded rank-1 attention scores (Wx@a folded into s1c/s2c in the wrapper).
    s1_all = jnp.dot(x, s1c_ref[...],
                     preferred_element_type=jnp.float32)             # [TN, H]
    s2_all = jnp.dot(y, s2c_ref[...],
                     preferred_element_type=jnp.float32)             # [M, H]
    # int8 adjacency -> f32-layout boolean mask (cheap VPU cast, 4x less DMA).
    mask = adj_ref[...].astype(jnp.float32) > 0.0                    # [TN, M]

    parts = []
    for h in range(nheads):                                          # static unroll
        e = s1_all[:, h:h + 1] + s2_all[:, h:h + 1].T                # [TN, M]
        e = jnp.where(e > 0, e, alpha * e)                           # LeakyReLU
        e = jnp.where(mask, e, NEG_INF)                              # adjacency mask
        m = jnp.max(e, axis=1, keepdims=True)
        p = jnp.exp(e - m)
        denom = jnp.sum(p, axis=1, keepdims=True)
        attn = p * pl.reciprocal(denom, approx=True)                 # softmax (dim=1)
        # nd_dropout on attn: identity in eval mode
        hp = jnp.dot(attn.astype(jnp.bfloat16),
                     h2_all[:, h * nhid:(h + 1) * nhid].astype(jnp.bfloat16),
                     preferred_element_type=jnp.float32)             # [TN, nhid]
        # ELU (concat=True); exp(min(h,0)) keeps the dead branch finite.
        parts.append(jnp.where(hp > 0, hp, jnp.exp(jnp.minimum(hp, 0.0)) - 1.0))
    # Single lane-dense store of the concatenated [TN, H*nhid] slab.
    o_ref[...] = jnp.concatenate(parts, axis=1).astype(o_ref.dtype)


def node_attention_type(x0_b, y_b, adj_i8, W2s_b, s1c_b, s2c_b, *, nhid, nheads):
    N, tfeat = x0_b.shape
    M, nf = y_b.shape
    HF = nhid * nheads
    TN = _pick_tile(N)
    grid = (N // TN,)
    # TODO(synk): for very large neighbor counts M, add an "arbitrary" M grid
    # axis with online-softmax accumulators instead of full-M residency, and
    # hoist h2_all so it is not recomputed per N-tile.
    return pl.pallas_call(
        functools.partial(_node_attention_kernel,
                          nhid=nhid, nheads=nheads, alpha=ALPHA),
        out_shape=jax.ShapeDtypeStruct((N, HF), jnp.bfloat16),
        grid=grid,
        in_specs=[
            pl.BlockSpec((TN, tfeat), lambda i: (i, 0)),   # x0 tile
            pl.BlockSpec((M, nf), lambda i: (0, 0)),       # y (resident)
            pl.BlockSpec((TN, M), lambda i: (i, 0)),       # adj tile (int8)
            pl.BlockSpec((nf, HF), lambda i: (0, 0)),      # stacked W2
            pl.BlockSpec((tfeat, nheads), lambda i: (0, 0)),  # folded W1@a1
            pl.BlockSpec((nf, nheads), lambda i: (0, 0)),     # folded W2@a2
        ],
        out_specs=pl.BlockSpec((TN, HF), lambda i: (i, 0)),
        compiler_params=pltpu.CompilerParams(dimension_semantics=("parallel",)),
    )(x0_b, y_b, adj_i8, W2s_b, s1c_b, s2c_b)


# ----------------------------------------------------------------------------
# Kernel 2: schema-level attention over types + linear layer + log_softmax.
# ----------------------------------------------------------------------------
def _schema_kernel(x_ref, v_ref, o_ref, ws_ref, wsa2_ref, wl_ref, bl_ref,
                   out_ref, *, num_types, alpha):
    # se_dropout: identity in eval mode.
    # Folded self score: s_self = x0 @ (W @ Ws @ a1s)   (v precomputed, [tfeat,1]).
    s_self = jnp.dot(x_ref[...], v_ref[...],
                     preferred_element_type=jnp.float32)             # [TN, 1]
    ws = ws_ref[...]                                                 # [F, shid] bf16
    wsa2 = wsa2_ref[...]                                             # [F, 1]    bf16

    h_list, e_list = [], []
    for t in range(num_types):                                       # static unroll
        o_t = o_ref[t]                                               # [TN, F] bf16
        h_t = jnp.dot(o_t, ws, preferred_element_type=jnp.float32)   # [TN, shid]
        s_t = jnp.dot(o_t, wsa2, preferred_element_type=jnp.float32) # [TN, 1]
        e_t = s_self + s_t
        e_t = jnp.where(e_t > 0, e_t, alpha * e_t)                   # LeakyReLU
        h_list.append(h_t)
        e_list.append(e_t)

    # Softmax over the (static) type axis.
    m = e_list[0]
    for t in range(1, num_types):
        m = jnp.maximum(m, e_list[t])
    p_list = [jnp.exp(e - m) for e in e_list]
    denom = p_list[0]
    for t in range(1, num_types):
        denom = denom + p_list[t]
    inv = pl.reciprocal(denom, approx=True)
    agg = (p_list[0] * inv) * h_list[0]
    for t in range(1, num_types):
        agg = agg + (p_list[t] * inv) * h_list[t]                    # [TN, shid]

    logits = jnp.dot(agg.astype(jnp.bfloat16), wl_ref[...],
                     preferred_element_type=jnp.float32) + bl_ref[...]  # [TN, C]
    lmax = jnp.max(logits, axis=1, keepdims=True)
    z = logits - lmax
    lse = jnp.log(jnp.sum(jnp.exp(z), axis=1, keepdims=True))
    out_ref[...] = z - lse                                           # log_softmax(dim=1)


def schema_forward(x0_b, v_b, o_stack, Ws_b, wsa2_b, Wl_b, bl):
    N, tfeat = x0_b.shape
    T, _, F = o_stack.shape
    shid = Ws_b.shape[1]
    nclass = Wl_b.shape[1]
    TN = _pick_tile(N)
    grid = (N // TN,)
    return pl.pallas_call(
        functools.partial(_schema_kernel, num_types=T, alpha=ALPHA),
        out_shape=jax.ShapeDtypeStruct((N, nclass), jnp.float32),
        grid=grid,
        in_specs=[
            pl.BlockSpec((TN, tfeat), lambda i: (i, 0)),     # x0 tile
            pl.BlockSpec((tfeat, 1), lambda i: (0, 0)),      # folded W@Ws@a1s
            pl.BlockSpec((T, TN, F), lambda i: (0, i, 0)),   # o_stack tile
            pl.BlockSpec((F, shid), lambda i: (0, 0)),       # Ws
            pl.BlockSpec((F, 1), lambda i: (0, 0)),          # folded Ws@a2s
            pl.BlockSpec((shid, nclass), lambda i: (0, 0)),  # Wl
            pl.BlockSpec((1, nclass), lambda i: (0, 0)),     # bl
        ],
        out_specs=pl.BlockSpec((TN, nclass), lambda i: (i, 0)),
        compiler_params=pltpu.CompilerParams(dimension_semantics=("parallel",)),
    )(x0_b, v_b, o_stack, Ws_b, wsa2_b, Wl_b, bl)


# ----------------------------------------------------------------------------
# HGAT forward (wrapper folds parameters; hot paths in the two kernels above).
# ----------------------------------------------------------------------------
def hgat_forward(x_list, adjs, params, nheads):
    x0 = x_list[0]
    x0_b = x0.astype(jnp.bfloat16)
    nhid = params["node"][0][0]["W2"].shape[1]

    o_list = []
    for i in range(len(x_list) - 1):
        heads = params["node"][i]
        # Stack per-head weights into one wide slab; fold rank-1 a-vectors.
        W2s = jnp.concatenate([h["W2"] for h in heads], axis=1)             # [nf, H*nhid]
        s1c = jnp.concatenate([h["W1"] @ h["a1"] for h in heads], axis=1)   # [tfeat, H]
        s2c = jnp.concatenate([h["W2"] @ h["a2"] for h in heads], axis=1)   # [nf, H]
        y_b = x_list[i + 1].astype(jnp.bfloat16)
        adj_i8 = (adjs[i] > 0).astype(jnp.int8)
        o_list.append(node_attention_type(
            x0_b, y_b, adj_i8,
            W2s.astype(jnp.bfloat16), s1c.astype(jnp.bfloat16),
            s2c.astype(jnp.bfloat16), nhid=nhid, nheads=nheads))
    o_stack = jnp.stack(o_list, axis=0)                                     # [T, N, H*nhid]

    # Schema-level parameter folds (parameter-only, done once per call, f32).
    v = (params["W"] @ params["Ws"]) @ params["a1s"]                        # [tfeat, 1]
    wsa2 = params["Ws"] @ params["a2s"]                                     # [F, 1]
    return schema_forward(x0_b, v.astype(jnp.bfloat16), o_stack,
                          params["Ws"].astype(jnp.bfloat16),
                          wsa2.astype(jnp.bfloat16),
                          params["Wl"].astype(jnp.bfloat16), params["bl"])


def init_params(key, tfeat, nfeat_list, nhid, shid, nclass, nheads):
    def u(k, shape, scale=0.3):
        return jax.random.uniform(k, shape, jnp.float32, -scale, scale)

    keys = iter(jax.random.split(key, 64))
    node = []
    for nf in nfeat_list:
        heads = []
        for _ in range(nheads):
            heads.append(dict(
                W1=u(next(keys), (tfeat, nhid)),
                W2=u(next(keys), (nf, nhid)),
                a1=u(next(keys), (nhid, 1)),
                a2=u(next(keys), (nhid, 1)),
            ))
        node.append(heads)
    F = nhid * nheads
    return dict(
        node=node,
        W=u(next(keys), (tfeat, F)),
        Ws=u(next(keys), (F, shid)),
        a1s=u(next(keys), (shid, 1)),
        a2s=u(next(keys), (shid, 1)),
        Wl=u(next(keys), (shid, nclass)),
        bl=u(next(keys), (1, nclass)),
    )


if __name__ == "__main__":
    key = jax.random.PRNGKey(0)
    N, tfeat, nhid, shid, nclass, nheads = 8, 16, 16, 16, 8, 2
    nfeat_list = [16, 16]

    k1, k2, k3, k4, k5, kp = jax.random.split(key, 6)
    x0 = jax.random.normal(k1, (N, tfeat), jnp.float32)
    x1 = jax.random.normal(k2, (N, nfeat_list[0]), jnp.float32)
    x2 = jax.random.normal(k3, (N, nfeat_list[1]), jnp.float32)
    adj0 = jnp.minimum((jax.random.uniform(k4, (N, N)) > 0.5).astype(jnp.float32)
                       + jnp.eye(N, dtype=jnp.float32), 1.0)
    adj1 = jnp.minimum((jax.random.uniform(k5, (N, N)) > 0.5).astype(jnp.float32)
                       + jnp.eye(N, dtype=jnp.float32), 1.0)

    params = init_params(kp, tfeat, nfeat_list, nhid, shid, nclass, nheads)

    out = hgat_forward([x0, x1, x2], [adj0, adj1], params, nheads=nheads)
    out = jax.block_until_ready(out)

    assert out.shape == (N, nclass)
    # rows of exp(log_softmax) must sum to 1
    assert bool(jnp.allclose(jnp.sum(jnp.exp(out), axis=1), 1.0, atol=1e-3))
    print("KERNEL_OK")
</pallas_src>

<mosaic_0001>
module attributes {stable_mosaic.version = 11 : i64} {
  func.func @_node_attention_kernel(%arg0: i32, %arg1: memref<8x16xbf16, #tpu.memory_space<vmem>>, %arg2: memref<8x16xbf16, #tpu.memory_space<vmem>>, %arg3: memref<8x8xi8, #tpu.memory_space<vmem>>, %arg4: memref<16x32xbf16, #tpu.memory_space<vmem>>, %arg5: memref<16x2xbf16, #tpu.memory_space<vmem>>, %arg6: memref<16x2xbf16, #tpu.memory_space<vmem>>, %arg7: memref<8x32xbf16, #tpu.memory_space<vmem>>) attributes {dimension_semantics = [#tpu.dimension_semantics<parallel>], iteration_bounds = array<i64: 1>, scalar_prefetch = 0 : i64, scratch_operands = 0 : i64, tpu.core_type = #tpu.core_type<tc>, window_params = [{transform_indices = @transform_0, window_bounds = array<i64: 8, 16>}, {pipeline_mode = #tpu.pipeline_mode<synchronous>, transform_indices = @transform_1, window_bounds = array<i64: 8, 16>}, {transform_indices = @transform_2, window_bounds = array<i64: 8, 8>}, {pipeline_mode = #tpu.pipeline_mode<synchronous>, transform_indices = @transform_3, window_bounds = array<i64: 16, 32>}, {pipeline_mode = #tpu.pipeline_mode<synchronous>, transform_indices = @transform_4, window_bounds = array<i64: 16, 2>}, {pipeline_mode = #tpu.pipeline_mode<synchronous>, transform_indices = @transform_5, window_bounds = array<i64: 16, 2>}, {transform_indices = @transform_6, window_bounds = array<i64: 8, 32>}]} {
    %c0 = arith.constant 0 : index
    %c0_0 = arith.constant 0 : index
    %0 = vector.load %arg1[%c0, %c0_0] : memref<8x16xbf16, #tpu.memory_space<vmem>>, vector<8x16xbf16>
    %c0_1 = arith.constant 0 : index
    %c0_2 = arith.constant 0 : index
    %1 = vector.load %arg2[%c0_1, %c0_2] : memref<8x16xbf16, #tpu.memory_space<vmem>>, vector<8x16xbf16>
    %c0_3 = arith.constant 0 : index
    %c0_4 = arith.constant 0 : index
    %2 = vector.load %arg4[%c0_3, %c0_4] : memref<16x32xbf16, #tpu.memory_space<vmem>>, vector<16x32xbf16>
    %cst = arith.constant dense<0.000000e+00> : vector<8x32xf32>
    %3 = tpu.matmul %1, %2, %cst {dimension_numbers = #tpu.dot_dimension_numbers<[1], [0], [0], [1], [0, 0, 1, 1], [], []>} : vector<8x16xbf16>, vector<16x32xbf16>, vector<8x32xf32> -> vector<8x32xf32>
    %c0_5 = arith.constant 0 : index
    %c0_6 = arith.constant 0 : index
    %4 = vector.load %arg5[%c0_5, %c0_6] : memref<16x2xbf16, #tpu.memory_space<vmem>>, vector<16x2xbf16>
    %cst_7 = arith.constant dense<0.000000e+00> : vector<8x2xf32>
    %5 = tpu.matmul %0, %4, %cst_7 {dimension_numbers = #tpu.dot_dimension_numbers<[1], [0], [0], [1], [0, 0, 1, 1], [], []>} : vector<8x16xbf16>, vector<16x2xbf16>, vector<8x2xf32> -> vector<8x2xf32>
    %c0_8 = arith.constant 0 : index
    %c0_9 = arith.constant 0 : index
    %6 = vector.load %arg6[%c0_8, %c0_9] : memref<16x2xbf16, #tpu.memory_space<vmem>>, vector<16x2xbf16>
    %cst_10 = arith.constant dense<0.000000e+00> : vector<8x2xf32>
    %7 = tpu.matmul %1, %6, %cst_10 {dimension_numbers = #tpu.dot_dimension_numbers<[1], [0], [0], [1], [0, 0, 1, 1], [], []>} : vector<8x16xbf16>, vector<16x2xbf16>, vector<8x2xf32> -> vector<8x2xf32>
    %c0_11 = arith.constant 0 : index
    %c0_12 = arith.constant 0 : index
    %8 = vector.load %arg3[%c0_11, %c0_12] : memref<8x8xi8, #tpu.memory_space<vmem>>, vector<8x8xi8>
    %9 = arith.sitofp %8 : vector<8x8xi8> to vector<8x8xf32>
    %cst_13 = arith.constant 0.000000e+00 : f32
    %10 = vector.broadcast %cst_13 : f32 to vector<8x8xf32>
    %11 = arith.cmpf ogt, %9, %10 : vector<8x8xf32>
    %12 = vector.extract_strided_slice %5 {offsets = [0, 0], sizes = [8, 1], strides = [1, 1]} : vector<8x2xf32> to vector<8x1xf32>
    %13 = vector.extract_strided_slice %7 {offsets = [0, 0], sizes = [8, 1], strides = [1, 1]} : vector<8x2xf32> to vector<8x1xf32>
    %14 = tpu.transpose %13, [1, 0] : vector<8x1xf32> -> vector<1x8xf32>
    %15 = vector.broadcast %12 : vector<8x1xf32> to vector<8x8xf32>
    %16 = vector.broadcast %14 : vector<1x8xf32> to vector<8x8xf32>
    %17 = arith.addf %15, %16 : vector<8x8xf32>
    %cst_14 = arith.constant 0.000000e+00 : f32
    %18 = vector.broadcast %cst_14 : f32 to vector<8x8xf32>
    %19 = arith.cmpf ogt, %17, %18 : vector<8x8xf32>
    %cst_15 = arith.constant 2.000000e-01 : f32
    %20 = vector.broadcast %cst_15 : f32 to vector<8x8xf32>
    %21 = arith.mulf %20, %17 : vector<8x8xf32>
    %22 = arith.select %19, %17, %21 : vector<8x8xi1>, vector<8x8xf32>
    %cst_16 = arith.constant -9.000000e+15 : f32
    %23 = vector.broadcast %cst_16 : f32 to vector<8x8xf32>
    %24 = arith.select %11, %22, %23 : vector<8x8xi1>, vector<8x8xf32>
    %cst_17 = arith.constant dense<0xFF800000> : vector<8xf32>
    %25 = vector.multi_reduction <maximumf>, %24, %cst_17 [1] : vector<8x8xf32> to vector<8xf32>
    %26 = vector.shape_cast %25 : vector<8xf32> to vector<8x1xf32>
    %27 = vector.broadcast %26 : vector<8x1xf32> to vector<8x8xf32>
    %28 = arith.subf %24, %27 : vector<8x8xf32>
    %29 = math.exp %28 : vector<8x8xf32>
    %cst_18 = arith.constant dense<0.000000e+00> : vector<8xf32>
    %30 = vector.multi_reduction <add>, %29, %cst_18 [1] : vector<8x8xf32> to vector<8xf32>
    %31 = vector.shape_cast %30 : vector<8xf32> to vector<8x1xf32>
    %32 = tpu.reciprocal %31 {approx = true} : vector<8x1xf32> -> vector<8x1xf32>
    %33 = vector.broadcast %32 : vector<8x1xf32> to vector<8x8xf32>
    %34 = arith.mulf %29, %33 : vector<8x8xf32>
    %35 = arith.truncf %34 : vector<8x8xf32> to vector<8x8xbf16>
    %36 = vector.extract_strided_slice %3 {offsets = [0, 0], sizes = [8, 16], strides = [1, 1]} : vector<8x32xf32> to vector<8x16xf32>
    %37 = arith.truncf %36 : vector<8x16xf32> to vector<8x16xbf16>
    %cst_19 = arith.constant dense<0.000000e+00> : vector<8x16xf32>
    %38 = tpu.matmul %35, %37, %cst_19 {dimension_numbers = #tpu.dot_dimension_numbers<[1], [0], [0], [1], [0, 0, 1, 1], [], []>} : vector<8x8xbf16>, vector<8x16xbf16>, vector<8x16xf32> -> vector<8x16xf32>
    %cst_20 = arith.constant 0.000000e+00 : f32
    %39 = vector.broadcast %cst_20 : f32 to vector<8x16xf32>
    %40 = arith.cmpf ogt, %38, %39 : vector<8x16xf32>
    %cst_21 = arith.constant 0.000000e+00 : f32
    %41 = vector.broadcast %cst_21 : f32 to vector<8x16xf32>
    %42 = arith.minimumf %38, %41 : vector<8x16xf32>
    %43 = math.exp %42 : vector<8x16xf32>
    %cst_22 = arith.constant 1.000000e+00 : f32
    %44 = vector.broadcast %cst_22 : f32 to vector<8x16xf32>
    %45 = arith.subf %43, %44 : vector<8x16xf32>
    %46 = arith.select %40, %38, %45 : vector<8x16xi1>, vector<8x16xf32>
    %47 = vector.extract_strided_slice %5 {offsets = [0, 1], sizes = [8, 1], strides = [1, 1]} : vector<8x2xf32> to vector<8x1xf32>
    %48 = vector.extract_strided_slice %7 {offsets = [0, 1], sizes = [8, 1], strides = [1, 1]} : vector<8x2xf32> to vector<8x1xf32>
    %49 = tpu.transpose %48, [1, 0] : vector<8x1xf32> -> vector<1x8xf32>
    %50 = vector.broadcast %47 : vector<8x1xf32> to vector<8x8xf32>
    %51 = vector.broadcast %49 : vector<1x8xf32> to vector<8x8xf32>
    %52 = arith.addf %50, %51 : vector<8x8xf32>
    %cst_23 = arith.constant 0.000000e+00 : f32
    %53 = vector.broadcast %cst_23 : f32 to vector<8x8xf32>
    %54 = arith.cmpf ogt, %52, %53 : vector<8x8xf32>
    %cst_24 = arith.constant 2.000000e-01 : f32
    %55 = vector.broadcast %cst_24 : f32 to vector<8x8xf32>
    %56 = arith.mulf %55, %52 : vector<8x8xf32>
    %57 = arith.select %54, %52, %56 : vector<8x8xi1>, vector<8x8xf32>
    %cst_25 = arith.constant -9.000000e+15 : f32
    %58 = vector.broadcast %cst_25 : f32 to vector<8x8xf32>
    %59 = arith.select %11, %57, %58 : vector<8x8xi1>, vector<8x8xf32>
    %cst_26 = arith.constant dense<0xFF800000> : vector<8xf32>
    %60 = vector.multi_reduction <maximumf>, %59, %cst_26 [1] : vector<8x8xf32> to vector<8xf32>
    %61 = vector.shape_cast %60 : vector<8xf32> to vector<8x1xf32>
    %62 = vector.broadcast %61 : vector<8x1xf32> to vector<8x8xf32>
    %63 = arith.subf %59, %62 : vector<8x8xf32>
    %64 = math.exp %63 : vector<8x8xf32>
    %cst_27 = arith.constant dense<0.000000e+00> : vector<8xf32>
    %65 = vector.multi_reduction <add>, %64, %cst_27 [1] : vector<8x8xf32> to vector<8xf32>
    %66 = vector.shape_cast %65 : vector<8xf32> to vector<8x1xf32>
    %67 = tpu.reciprocal %66 {approx = true} : vector<8x1xf32> -> vector<8x1xf32>
    %68 = vector.broadcast %67 : vector<8x1xf32> to vector<8x8xf32>
    %69 = arith.mulf %64, %68 : vector<8x8xf32>
    %70 = arith.truncf %69 : vector<8x8xf32> to vector<8x8xbf16>
    %71 = vector.extract_strided_slice %3 {offsets = [0, 16], sizes = [8, 16], strides = [1, 1]} : vector<8x32xf32> to vector<8x16xf32>
    %72 = arith.truncf %71 : vector<8x16xf32> to vector<8x16xbf16>
    %cst_28 = arith.constant dense<0.000000e+00> : vector<8x16xf32>
    %73 = tpu.matmul %70, %72, %cst_28 {dimension_numbers = #tpu.dot_dimension_numbers<[1], [0], [0], [1], [0, 0, 1, 1], [], []>} : vector<8x8xbf16>, vector<8x16xbf16>, vector<8x16xf32> -> vector<8x16xf32>
    %cst_29 = arith.constant 0.000000e+00 : f32
    %74 = vector.broadcast %cst_29 : f32 to vector<8x16xf32>
    %75 = arith.cmpf ogt, %73, %74 : vector<8x16xf32>
    %cst_30 = arith.constant 0.000000e+00 : f32
    %76 = vector.broadcast %cst_30 : f32 to vector<8x16xf32>
    %77 = arith.minimumf %73, %76 : vector<8x16xf32>
    %78 = math.exp %77 : vector<8x16xf32>
    %cst_31 = arith.constant 1.000000e+00 : f32
    %79 = vector.broadcast %cst_31 : f32 to vector<8x16xf32>
    %80 = arith.subf %78, %79 : vector<8x16xf32>
    %81 = arith.select %75, %73, %80 : vector<8x16xi1>, vector<8x16xf32>
    %82 = tpu.concatenate %46, %81 in 1 : vector<8x16xf32>, vector<8x16xf32> -> vector<8x32xf32>
    %83 = arith.truncf %82 : vector<8x32xf32> to vector<8x32xbf16>
    %c0_32 = arith.constant 0 : index
    %c0_33 = arith.constant 0 : index
    %84 = vector.load %arg7[%c0_32, %c0_33] : memref<8x32xbf16, #tpu.memory_space<vmem>>, vector<8x32xbf16>
    tpu.vector_store %arg7[%c0_32, %c0_33], %83 {strides = array<i32>} : memref<8x32xbf16, #tpu.memory_space<vmem>>, vector<8x32xbf16>,
    return
  }
  func.func @transform_0(%arg0: i32) -> (i32, i32) {
    %c0_i32 = arith.constant 0 : i32
    %c0_i32_0 = arith.constant 0 : i32
    return %arg0, %c0_i32 : i32, i32
  }
  func.func @transform_1(%arg0: i32) -> (i32, i32) {
    %c0_i32 = arith.constant 0 : i32
    %c0_i32_0 = arith.constant 0 : i32
    %c0_i32_1 = arith.constant 0 : i32
    return %c0_i32, %c0_i32_0 : i32, i32
  }
  func.func @transform_2(%arg0: i32) -> (i32, i32) {
    %c0_i32 = arith.constant 0 : i32
    %c0_i32_0 = arith.constant 0 : i32
    return %arg0, %c0_i32 : i32, i32
  }
  func.func @transform_3(%arg0: i32) -> (i32, i32) {
    %c0_i32 = arith.constant 0 : i32
    %c0_i32_0 = arith.constant 0 : i32
    %c0_i32_1 = arith.constant 0 : i32
    return %c0_i32, %c0_i32_0 : i32, i32
  }
  func.func @transform_4(%arg0: i32) -> (i32, i32) {
    %c0_i32 = arith.constant 0 : i32
    %c0_i32_0 = arith.constant 0 : i32
    %c0_i32_1 = arith.constant 0 : i32
    return %c0_i32, %c0_i32_0 : i32, i32
  }
  func.func @transform_5(%arg0: i32) -> (i32, i32) {
    %c0_i32 = arith.constant 0 : i32
    %c0_i32_0 = arith.constant 0 : i32
    %c0_i32_1 = arith.constant 0 : i32
    return %c0_i32, %c0_i32_0 : i32, i32
  }
  func.func @transform_6(%arg0: i32) -> (i32, i32) {
    %c0_i32 = arith.constant 0 : i32
    %c0_i32_0 = arith.constant 0 : i32
    return %arg0, %c0_i32 : i32, i32
  }
}

</mosaic_0001>

<llo_original>
// kernel: tpu_custom_call.1
$region0: #{tpu_custom_call.1}
  #allocation0 [shape = 'u32[]', space=smem, size = 0x4, offset = 0x4, fixed_abs, tag = 'smem constant byte address 0x4 - core index']
  #allocation1 [shape = 'u32[144,128]{1,0:T(1,128)}', space=vmem, size = 0x12000, scoped, tag = 'internal scratch']
  %s0 = inlined_call_operand.vmem [shape: bf16[8,16], index: 0, kind: input, shape index: {}]
  %s1 = inlined_call_operand.vmem [shape: bf16[8,16], index: 1, kind: input, shape index: {}]
  %s2 = inlined_call_operand.vmem [shape: s8[8,8], index: 2, kind: input, shape index: {}]
  %s3 = inlined_call_operand.vmem [shape: bf16[16,32], index: 3, kind: input, shape index: {}]
  %s4 = inlined_call_operand.vmem [shape: bf16[16,2], index: 4, kind: input, shape index: {}]
  %s5 = inlined_call_operand.vmem [shape: bf16[16,2], index: 5, kind: input, shape index: {}]
  %s6 = inlined_call_operand.hbm [shape: bf16[8,32], index: 6, kind: output, shape index: {}]
  %s7 = sld [smem:[#allocation0]]
  $region34: #{tpu_custom_call.1} parent=0
    _
  %s9 = ssub.s32 1, %s7
  %s10 = scalar_select 0, %s9, %s7
  $region1: #{tpu_custom_call.1} parent=0
    #allocation2 [shape = 'u8[2048]{0}', space=vmem, size = 0x800, scoped, tag = 'output window, operand 0, single buffered']
    #allocation3 [shape = 's32[1]{0}', space=sflag, size = 0x4, scoped, tag = 'scoped memory for tpu_custom_call.1']
    %11 = vsyncpa [#allocation3], 0
    // Predicated region
    $region2: #{tpu_custom_call.1} parent=1 // pred_check
      _
    $region3: #{tpu_custom_call.1} parent=1 // pred_check_branch
      %13 = sbr.rel (0) target = $region5
    $region4: #{tpu_custom_call.1} parent=1 // pred_region
      _
    $region5: #{tpu_custom_call.1} parent=1 // pred_fallthru
      _
    // Predicated region
    $region6: #{tpu_custom_call.1} parent=1 // pred_check
      _
    $region7: #{tpu_custom_call.1} parent=1 // pred_check_branch
      %15 = sbr.rel (0) target = $region9
    $region8: #{tpu_custom_call.1} parent=1 // pred_region
      _
    $region9: #{tpu_custom_call.1} parent=1 // pred_fallthru
      _
    // Predicated region
    $region10: #{tpu_custom_call.1} parent=1 // pred_check
      _
    $region11: #{tpu_custom_call.1} parent=1 // pred_check_branch
      %17 = sbr.rel (0) target = $region13
    $region12: #{tpu_custom_call.1} parent=1 // pred_region
      _
    $region13: #{tpu_custom_call.1} parent=1 // pred_fallthru
      _
    // Predicated region
    $region14: #{tpu_custom_call.1} parent=1 // pred_check
      _
    $region15: #{tpu_custom_call.1} parent=1 // pred_check_branch
      %19 = sbr.rel (0) target = $region17
    $region16: #{tpu_custom_call.1} parent=1 // pred_region
      _
    $region17: #{tpu_custom_call.1} parent=1 // pred_fallthru
      _
    // Predicated region
    $region18: #{tpu_custom_call.1} parent=1 // pred_check
      _
    $region19: #{tpu_custom_call.1} parent=1 // pred_check_branch
      %21 = sbr.rel (0) target = $region21
    $region20: #{tpu_custom_call.1} parent=1 // pred_region
      _
    $region21: #{tpu_custom_call.1} parent=1 // pred_fallthru
      _
    // Predicated region
    $region22: #{tpu_custom_call.1} parent=1 // pred_check
      _
    $region23: #{tpu_custom_call.1} parent=1 // pred_check_branch
      %23 = sbr.rel (0) target = $region25
    $region24: #{tpu_custom_call.1} parent=1 // pred_region
      _
    $region25: #{tpu_custom_call.1} parent=1 // pred_fallthru
      _
    %v25 = vld [vmem:[%s0] sm:$0xf]
    %v26 = vld [vmem:[%s1] sm:$0xf]
    %v27 = vld [vmem:[%s3] sm:$0xf]
    %v28 = vld [vmem:[%s3 + $0x4] sm:$0xf]
    %v31 = vunpack.c.l.b16 %v27
    %v32 = vunpack.c.l.b16 %v28
    %v33 = vpack.c.b16 %v32, %v31
    %vm35 = vcmask 130048
    %v37 = vsel %vm35, %v26, 0
    %39 = vmatprep.subr.bf16.mxu0 0
    %40 = vmatpush1.bf16.msra.mxu0 0
    %41 = vmatprep.subr.bf16.mxu0 0
    %42 = vmatpush1.bf16.msra.mxu0 0
    %43 = vmatprep.subr.bf16.mxu0 0
    %44 = vmatpush1.bf16.msra.mxu0 0
    %45 = vmatprep.subr.bf16.mxu0 0
    %46 = vmatpush1.bf16.msra.mxu0 0
    %47 = vmatprep.subr.bf16.mxu0 0
    %48 = vmatpush1.bf16.msra.mxu0 0
    %49 = vmatprep.subr.bf16.mxu0 0
    %50 = vmatpush1.bf16.msra.mxu0 0
    %51 = vmatprep.subr.bf16.mxu0 0
    %52 = vmatpush1.bf16.msra.mxu0 0
    %53 = vmatprep.subr.bf16.mxu0 0
    %54 = vmatpush1.bf16.msra.mxu0 %v33
    %55 = vmatprep.subr.bf16.mxu0 0
    %56 = vmatpush2.bf16.msra.mxu0 0
    %57 = vmatprep.subr.bf16.mxu0 0
    %58 = vmatpush2.bf16.msra.mxu0 0
    %59 = vmatprep.subr.bf16.mxu0 0
    %60 = vmatpush2.bf16.msra.mxu0 0
    %61 = vmatprep.subr.bf16.mxu0 0
    %62 = vmatpush2.bf16.msra.mxu0 0
    %63 = vmatprep.subr.bf16.mxu0 0
    %64 = vmatpush2.bf16.msra.mxu0 0
    %65 = vmatprep.subr.bf16.mxu0 0
    %66 = vmatpush2.bf16.msra.mxu0 0
    %67 = vmatprep.subr.bf16.mxu0 0
    %68 = vmatpush2.bf16.msra.mxu0 0
    %69 = vmatprep.subr.bf16.mxu0 0
    %70 = vmatpush2.bf16.msra.mxu0 0
    %71 = vmatprep.mubr.bf16.mxu0 0
    %72 = vmatmul.mubr.bf16.gmra.mxu0 %v37
    %v73 = vpop.f32.mrf.mxu0
    %v74 = vadd.f32 0.0, %v73
    %v75 = vpop.f32.mrf.mxu0
    %v76 = vpop.f32.mrf.mxu0
    %v77 = vpop.f32.mrf.mxu0
    %78 = vdwg.mxu0
    %v79 = vld [vmem:[%s4] sm:$0xf]
    %v80 = vld [vmem:[%s4 + $0x4] sm:$0xf]
    %v83 = vunpack.c.l.b16 %v79
    %v84 = vunpack.c.l.b16 %v80
    %v85 = vpack.c.b16 %v84, %v83
    %v88 = vsel %vm35, %v25, 0
    %90 = vmatprep.subr.bf16.mxu0 0
    %91 = vmatpush1.bf16.msra.mxu0 0
    %92 = vmatprep.subr.bf16.mxu0 0
    %93 = vmatpush1.bf16.msra.mxu0 0
    %94 = vmatprep.subr.bf16.mxu0 0
    %95 = vmatpush1.bf16.msra.mxu0 0
    %96 = vmatprep.subr.bf16.mxu0 0
    %97 = vmatpush1.bf16.msra.mxu0 0
    %98 = vmatprep.subr.bf16.mxu0 0
    %99 = vmatpush1.bf16.msra.mxu0 0
    %100 = vmatprep.subr.bf16.mxu0 0
    %101 = vmatpush1.bf16.msra.mxu0 0
    %102 = vmatprep.subr.bf16.mxu0 0
    %103 = vmatpush1.bf16.msra.mxu0 0
    %104 = vmatprep.subr.bf16.mxu0 0
    %105 = vmatpush1.bf16.msra.mxu0 %v85
    %106 = vmatprep.subr.bf16.mxu0 0
    %107 = vmatpush2.bf16.msra.mxu0 0
    %108 = vmatprep.subr.bf16.mxu0 0
    %109 = vmatpush2.bf16.msra.mxu0 0
    %110 = vmatprep.subr.bf16.mxu0 0
    %111 = vmatpush2.bf16.msra.mxu0 0
    %112 = vmatprep.subr.bf16.mxu0 0
    %113 = vmatpush2.bf16.msra.mxu0 0
    %114 = vmatprep.subr.bf16.mxu0 0
    %115 = vmatpush2.bf16.msra.mxu0 0
    %116 = vmatprep.subr.bf16.mxu0 0
    %117 = vmatpush2.bf16.msra.mxu0 0
    %118 = vmatprep.subr.bf16.mxu0 0
    %119 = vmatpush2.bf16.msra.mxu0 0
    %120 = vmatprep.subr.bf16.mxu0 0
    %121 = vmatpush2.bf16.msra.mxu0 0
    %122 = vmatprep.mubr.bf16.mxu0 0
    %123 = vmatmul.mubr.bf16.gmra.mxu0 %v88
    %v124 = vpop.f32.mrf.mxu0
    %v125 = vadd.f32 0.0, %v124
    %v126 = vpop.f32.mrf.mxu0
    %v127 = vpop.f32.mrf.mxu0
    %v128 = vpop.f32.mrf.mxu0
    %129 = vdwg.mxu0
    %v130 = vld [vmem:[%s5] sm:$0xf]
    %v131 = vld [vmem:[%s5 + $0x4] sm:$0xf]
    %v134 = vunpack.c.l.b16 %v130
    %v135 = vunpack.c.l.b16 %v131
    %v136 = vpack.c.b16 %v135, %v134
    %138 = vmatprep.subr.bf16.mxu0 0
    %139 = vmatpush1.bf16.msra.mxu0 0
    %140 = vmatprep.subr.bf16.mxu0 0
    %141 = vmatpush1.bf16.msra.mxu0 0
    %142 = vmatprep.subr.bf16.mxu0 0
    %143 = vmatpush1.bf16.msra.mxu0 0
    %144 = vmatprep.subr.bf16.mxu0 0
    %145 = vmatpush1.bf16.msra.mxu0 0
    %146 = vmatprep.subr.bf16.mxu0 0
    %147 = vmatpush1.bf16.msra.mxu0 0
    %148 = vmatprep.subr.bf16.mxu0 0
    %149 = vmatpush1.bf16.msra.mxu0 0
    %150 = vmatprep.subr.bf16.mxu0 0
    %151 = vmatpush1.bf16.msra.mxu0 0
    %152 = vmatprep.subr.bf16.mxu0 0
    %153 = vmatpush1.bf16.msra.mxu0 %v136
    %154 = vmatprep.subr.bf16.mxu0 0
    %155 = vmatpush2.bf16.msra.mxu0 0
    %156 = vmatprep.subr.bf16.mxu0 0
    %157 = vmatpush2.bf16.msra.mxu0 0
    %158 = vmatprep.subr.bf16.mxu0 0
    %159 = vmatpush2.bf16.msra.mxu0 0
    %160 = vmatprep.subr.bf16.mxu0 0
    %161 = vmatpush2.bf16.msra.mxu0 0
    %162 = vmatprep.subr.bf16.mxu0 0
    %163 = vmatpush2.bf16.msra.mxu0 0
    %164 = vmatprep.subr.bf16.mxu0 0
    %165 = vmatpush2.bf16.msra.mxu0 0
    %166 = vmatprep.subr.bf16.mxu0 0
    %167 = vmatpush2.bf16.msra.mxu0 0
    %168 = vmatprep.subr.bf16.mxu0 0
    %169 = vmatpush2.bf16.msra.mxu0 0
    %170 = vmatprep.mubr.bf16.mxu0 0
    %171 = vmatmul.mubr.bf16.gmra.mxu0 %v37
    %v172 = vpop.f32.mrf.mxu0
    %v173 = vadd.f32 0.0, %v172
    %v174 = vpop.f32.mrf.mxu0
    %v175 = vpop.f32.mrf.mxu0
    %v176 = vpop.f32.mrf.mxu0
    %177 = vdwg.mxu0
    %v178 = vld [vmem:[%s2] sm:$0x3]
    %v179 = vunpack.c.0.s8 %v178
    %v180 = vcvt.s32.f32 %v179
    %vm181 = vcmp.gt.f32.partialorder %v180, 0.0
    %182 = vxpose.xlu0.b32.start [1/16] %v173, 128
    %183 = vxpose.xlu0.b32.cont [2/16] 0.0, 128
    %184 = vxpose.xlu0.b32.cont [3/16] 0.0, 128
    %185 = vxpose.xlu0.b32.cont [4/16] 0.0, 128
    %186 = vxpose.xlu0.b32.cont [5/16] 0.0, 128
    %187 = vxpose.xlu0.b32.cont [6/16] 0.0, 128
    %188 = vxpose.xlu0.b32.cont [7/16] 0.0, 128
    %189 = vxpose.xlu0.b32.cont [8/16] 0.0, 128
    %190 = vxpose.xlu0.b32.cont [9/16] 0.0, 128
    %191 = vxpose.xlu0.b32.cont [10/16] 0.0, 128
    %192 = vxpose.xlu0.b32.cont [11/16] 0.0, 128
    %193 = vxpose.xlu0.b32.cont [12/16] 0.0, 128
    %194 = vxpose.xlu0.b32.cont [13/16] 0.0, 128
    %195 = vxpose.xlu0.b32.cont [14/16] 0.0, 128
    %196 = vxpose.xlu0.b32.cont [15/16] 0.0, 128
    %197 = vxpose.xlu0.b32.end [16/16] 0.0, 128
    %v198 = vpop.trf.xlu0
    %v199 = vpop.trf.xlu0
    %v200 = vpop.trf.xlu0
    %v201 = vpop.trf.xlu0
    %v202 = vpop.trf.xlu0
    %v203 = vpop.trf.xlu0
    %v204 = vpop.trf.xlu0
    %v205 = vpop.trf.xlu0
    %v206 = vpop.trf.xlu0
    %v207 = vpop.trf.xlu0
    %v208 = vpop.trf.xlu0
    %v209 = vpop.trf.xlu0
    %v210 = vpop.trf.xlu0
    %v211 = vpop.trf.xlu0
    %v212 = vpop.trf.xlu0
    %v213 = vpop.trf.xlu0
    %215 = vset.pattern.permute.xlu0 0
    %216 = vperm.xlu0 %215, %v125
    %v217 = vpop.permute.xlu0 %216
    %v219 = vlaneseq
    %v220 = vshrl.u32 %v219, 7
    %v221 = vsub.s32 0, %v220
    %v222 = vrot.slane %v198, %v221
    %v223 = vadd.f32 %v217, %v222
    %vm224 = vcmp.gt.f32.partialorder %v223, 0.0
    %v225 = vmul.f32 %v223, 0.2
    %v226 = vsel %vm224, %v223, %v225
    %v227 = vsel %vm181, %v226, -9e+15
    %vm228 = vcmask 64512
    %v229 = vsel %vm228, %v227, -inf
    %230 = vmax.xlane.f32.xlu0 %v229
    %v231 = vpop.xlane.xlu0 %230
    %v232 = vsub.f32 %v227, %v231
    %v233 = vmul.f32 %v232, 1.442695
    %v234 = vpow.pop %v233
    %v235 = vsel %vm228, %v234, 0.0
    %236 = vadd.xlane.f32.xlu0 %v235
    %v237 = vpop.xlane.xlu0 %236
    %v238 = vrcp.pop %v237
    %v239 = vmul.f32 %v234, %v238
    %v240 = vpack.c.bf16 %v239, %v239
    %v241 = vpack.c.bf16 %v74, %v74
    %v243 = vsel %vm228, %v240, 0
    %vm245 = vcmask 1043456
    %v247 = vsel %vm245, %v241, 0
    %249 = vmatprep.subr.bf16.mxu0 0
    %250 = vmatpush1.bf16.msra.mxu0 0
    %251 = vmatprep.subr.bf16.mxu0 0
    %252 = vmatpush1.bf16.msra.mxu0 0
    %253 = vmatprep.subr.bf16.mxu0 0
    %254 = vmatpush1.bf16.msra.mxu0 0
    %255 = vmatprep.subr.bf16.mxu0 0
    %256 = vmatpush1.bf16.msra.mxu0 0
    %257 = vmatprep.subr.bf16.mxu0 0
    %258 = vmatpush1.bf16.msra.mxu0 0
    %259 = vmatprep.subr.bf16.mxu0 0
    %260 = vmatpush1.bf16.msra.mxu0 0
    %261 = vmatprep.subr.bf16.mxu0 0
    %262 = vmatpush1.bf16.msra.mxu0 0
    %263 = vmatprep.subr.bf16.mxu0 0
    %264 = vmatpush1.bf16.msra.mxu0 %v247
    %265 = vmatprep.subr.bf16.mxu0 0
    %266 = vmatpush2.bf16.msra.mxu0 0
    %267 = vmatprep.subr.bf16.mxu0 0
    %268 = vmatpush2.bf16.msra.mxu0 0
    %269 = vmatprep.subr.bf16.mxu0 0
    %270 = vmatpush2.bf16.msra.mxu0 0
    %271 = vmatprep.subr.bf16.mxu0 0
    %272 = vmatpush2.bf16.msra.mxu0 0
    %273 = vmatprep.subr.bf16.mxu0 0
    %274 = vmatpush2.bf16.msra.mxu0 0
    %275 = vmatprep.subr.bf16.mxu0 0
    %276 = vmatpush2.bf16.msra.mxu0 0
    %277 = vmatprep.subr.bf16.mxu0 0
    %278 = vmatpush2.bf16.msra.mxu0 0
    %279 = vmatprep.subr.bf16.mxu0 0
    %280 = vmatpush2.bf16.msra.mxu0 0
    %281 = vmatprep.mubr.bf16.mxu0 0
    %282 = vmatmul.mubr.bf16.gmra.mxu0 %v243
    %v283 = vpop.f32.mrf.mxu0
    %v284 = vadd.f32 0.0, %v283
    %v285 = vpop.f32.mrf.mxu0
    %v286 = vpop.f32.mrf.mxu0
    %v287 = vpop.f32.mrf.mxu0
    %288 = vdwg.mxu0
    %vm289 = vcmp.gt.f32.partialorder %v284, 0.0
    %v290 = vmin.f32 %v284, 0.0
    %v291 = vmul.f32 %v290, 1.442695
    %v292 = vpow.pop %v291
    %v293 = vsub.f32 %v292, 1.0
    %v294 = vsel %vm289, %v284, %v293
    %296 = vrot.lane.b32.xlu0 %v173, 127
    %v297 = vpop.permute.xlu0 %296
    %299 = vxpose.xlu0.b32.start [1/16] %v297, 128
    %300 = vxpose.xlu0.b32.cont [2/16] 0.0, 128
    %301 = vxpose.xlu0.b32.cont [3/16] 0.0, 128
    %302 = vxpose.xlu0.b32.cont [4/16] 0.0, 128
    %303 = vxpose.xlu0.b32.cont [5/16] 0.0, 128
    %304 = vxpose.xlu0.b32.cont [6/16] 0.0, 128
    %305 = vxpose.xlu0.b32.cont [7/16] 0.0, 128
    %306 = vxpose.xlu0.b32.cont [8/16] 0.0, 128
    %307 = vxpose.xlu0.b32.cont [9/16] 0.0, 128
    %308 = vxpose.xlu0.b32.cont [10/16] 0.0, 128
    %309 = vxpose.xlu0.b32.cont [11/16] 0.0, 128
    %310 = vxpose.xlu0.b32.cont [12/16] 0.0, 128
    %311 = vxpose.xlu0.b32.cont [13/16] 0.0, 128
    %312 = vxpose.xlu0.b32.cont [14/16] 0.0, 128
    %313 = vxpose.xlu0.b32.cont [15/16] 0.0, 128
    %314 = vxpose.xlu0.b32.end [16/16] 0.0, 128
    %v315 = vpop.trf.xlu0
    %v316 = vpop.trf.xlu0
    %v317 = vpop.trf.xlu0
    %v318 = vpop.trf.xlu0
    %v319 = vpop.trf.xlu0
    %v320 = vpop.trf.xlu0
    %v321 = vpop.trf.xlu0
    %v322 = vpop.trf.xlu0
    %v323 = vpop.trf.xlu0
    %v324 = vpop.trf.xlu0
    %v325 = vpop.trf.xlu0
    %v326 = vpop.trf.xlu0
    %v327 = vpop.trf.xlu0
    %v328 = vpop.trf.xlu0
    %v329 = vpop.trf.xlu0
    %v330 = vpop.trf.xlu0
    %331 = vset.pattern.permute.xlu0 1
    %332 = vperm.xlu0 %331, %v125
    %v333 = vpop.permute.xlu0 %332
    %v335 = vlaneseq
    %v336 = vshrl.u32 %v335, 7
    %v337 = vsub.s32 0, %v336
    %v338 = vrot.slane %v315, %v337
    %v339 = vadd.f32 %v333, %v338
    %vm340 = vcmp.gt.f32.partialorder %v339, 0.0
    %v341 = vmul.f32 %v339, 0.2
    %v342 = vsel %vm340, %v339, %v341
    %v343 = vsel %vm181, %v342, -9e+15
    %v344 = vsel %vm228, %v343, -inf
    %345 = vmax.xlane.f32.xlu0 %v344
    %v346 = vpop.xlane.xlu0 %345
    %v347 = vsub.f32 %v343, %v346
    %v348 = vmul.f32 %v347, 1.442695
    %v349 = vpow.pop %v348
    %v350 = vsel %vm228, %v349, 0.0
    %351 = vadd.xlane.f32.xlu0 %v350
    %v352 = vpop.xlane.xlu0 %351
    %v353 = vrcp.pop %v352
    %v354 = vmul.f32 %v349, %v353
    %v355 = vpack.c.bf16 %v354, %v354
    %357 = vrot.lane.b32.xlu0 %v241, 112
    %v358 = vpop.permute.xlu0 %357
    %v360 = vsel %vm228, %v355, 0
    %v363 = vsel %vm245, %v358, 0
    %365 = vmatprep.subr.bf16.mxu0 0
    %366 = vmatpush1.bf16.msra.mxu0 0
    %367 = vmatprep.subr.bf16.mxu0 0
    %368 = vmatpush1.bf16.msra.mxu0 0
    %369 = vmatprep.subr.bf16.mxu0 0
    %370 = vmatpush1.bf16.msra.mxu0 0
    %371 = vmatprep.subr.bf16.mxu0 0
    %372 = vmatpush1.bf16.msra.mxu0 0
    %373 = vmatprep.subr.bf16.mxu0 0
    %374 = vmatpush1.bf16.msra.mxu0 0
    %375 = vmatprep.subr.bf16.mxu0 0
    %376 = vmatpush1.bf16.msra.mxu0 0
    %377 = vmatprep.subr.bf16.mxu0 0
    %378 = vmatpush1.bf16.msra.mxu0 0
    %379 = vmatprep.subr.bf16.mxu0 0
    %380 = vmatpush1.bf16.msra.mxu0 %v363
    %381 = vmatprep.subr.bf16.mxu0 0
    %382 = vmatpush2.bf16.msra.mxu0 0
    %383 = vmatprep.subr.bf16.mxu0 0
    %384 = vmatpush2.bf16.msra.mxu0 0
    %385 = vmatprep.subr.bf16.mxu0 0
    %386 = vmatpush2.bf16.msra.mxu0 0
    %387 = vmatprep.subr.bf16.mxu0 0
    %388 = vmatpush2.bf16.msra.mxu0 0
    %389 = vmatprep.subr.bf16.mxu0 0
    %390 = vmatpush2.bf16.msra.mxu0 0
    %391 = vmatprep.subr.bf16.mxu0 0
    %392 = vmatpush2.bf16.msra.mxu0 0
    %393 = vmatprep.subr.bf16.mxu0 0
    %394 = vmatpush2.bf16.msra.mxu0 0
    %395 = vmatprep.subr.bf16.mxu0 0
    %396 = vmatpush2.bf16.msra.mxu0 0
    %397 = vmatprep.mubr.bf16.mxu0 0
    %398 = vmatmul.mubr.bf16.gmra.mxu0 %v360
    %v399 = vpop.f32.mrf.mxu0
    %v400 = vadd.f32 0.0, %v399
    %v401 = vpop.f32.mrf.mxu0
    %v402 = vpop.f32.mrf.mxu0
    %v403 = vpop.f32.mrf.mxu0
    %404 = vdwg.mxu0
    %vm405 = vcmp.gt.f32.partialorder %v400, 0.0
    %v406 = vmin.f32 %v400, 0.0
    %v407 = vmul.f32 %v406, 1.442695
    %v408 = vpow.pop %v407
    %v409 = vsub.f32 %v408, 1.0
    %v410 = vsel %vm405, %v400, %v409
    %412 = vrot.lane.b32.xlu0 %v410, 16
    %v413 = vpop.permute.xlu0 %412
    %v415 = vsel %vm35, %v294, %v413
    %v416 = vpack.c.bf16 %v415, %v415
    %vm417 = vcmask 257024
    %418 = vst.msk [vmem:[#allocation2] sm:$0xf] %vm417, %v416
    // Predicated region
    $region26: #{tpu_custom_call.1} parent=1 // pred_check
      _
    $region27: #{tpu_custom_call.1} parent=1 // pred_check_branch
      %420 = sbr.rel (0) target = $region29
    $region28: #{tpu_custom_call.1} parent=1 // pred_region
      %s422 = ssub.s32 64, 64
      %423 = vsyncadd [#allocation3], %s422
      %s425 = sshll.u32 [#allocation2], 4
      %s426 = int_to_ptr.vmem [resolvable:$true] %s425
      %428 = dma.vmem_to_hbm [thread:$0]  %s426, 64, %s6, [#allocation3]
    $region29: #{tpu_custom_call.1} parent=1 // pred_fallthru
      _
    // Predicated region
    $region30: #{tpu_custom_call.1} parent=1 // pred_check
      _
    $region31: #{tpu_custom_call.1} parent=1 // pred_check_branch
      %430 = sbr.rel (0) target = $region33
    $region32: #{tpu_custom_call.1} parent=1 // pred_region
      %431 = dma.done [#allocation3], 64
    $region33: #{tpu_custom_call.1} parent=1 // pred_fallthru
      _
    %432 = vsyncpa [#allocation3], 1

</llo_original>
